<compile_context>
chip_gen: v6e
topology: v6e:2x2x1
jax: 0.10.0
libtpu: 0.0.40
codegen_flags: <defaults>
</compile_context>

<pallas_src>
import jax
import jax.numpy as jnp
from jax.experimental import pallas as pl
from jax.experimental.pallas import tpu as pltpu


# ----------------------------------------------------------------------------- kernels


def _dropout_kernel(x_ref, word_ref, locked_ref, o_ref):
    # x: (1, TILE_S, H) * word: (1, TILE_S, 1) * locked: (1, 1, H)  -> broadcast multiplies
    o_ref[...] = (x_ref[...] * word_ref[...] * locked_ref[...]).astype(o_ref.dtype)


def _dropout_kernel_elem(x_ref, word_ref, locked_ref, elem_ref, o_ref):
    o_ref[...] = (
        x_ref[...] * elem_ref[...] * word_ref[...] * locked_ref[...]
    ).astype(o_ref.dtype)


# ----------------------------------------------------------------------------- mask construction


def _make_masks(seed, shape, dtype, p, word_p, locked_p):
    """Deterministic keep-masks matching CombinedDropout semantics (scales pre-folded)."""
    B, S, H = shape
    key = jax.random.PRNGKey(seed)
    k_elem, k_word, k_locked = jax.random.split(key, 3)

    # WordDropout: keep prob (1 - word_p), keep_exp=False -> no rescale.
    if word_p > 0.0:
        word_mask = (jax.random.uniform(k_word, (B, S, 1)) >= word_p).astype(dtype)
    else:
        word_mask = jnp.ones((B, S, 1), dtype)

    # LockedDropout: keep prob (1 - locked_p), rescaled by 1/(1 - locked_p).
    if locked_p > 0.0:
        locked_mask = (jax.random.uniform(k_locked, (B, 1, H)) >= locked_p).astype(dtype)
        locked_mask = locked_mask * jnp.asarray(1.0 / (1.0 - locked_p), dtype)
    else:
        locked_mask = jnp.ones((B, 1, H), dtype)

    # nn.Dropout: per-element keep prob (1 - p), rescaled by 1/(1 - p).
    elem_mask = None
    if p > 0.0:
        elem_mask = (jax.random.uniform(k_elem, (B, S, H)) >= p).astype(dtype)
        elem_mask = elem_mask * jnp.asarray(1.0 / (1.0 - p), dtype)

    return elem_mask, word_mask, locked_mask


def _choose_tile_s(S, H, dtype):
    """Largest row-tile (multiple of 16) keeping one x tile around ~2 MiB (safe on v5e/v6e/v7x)."""
    itemsize = jnp.dtype(dtype).itemsize
    budget_bytes = 2 * 1024 * 1024
    rows = max(16, (budget_bytes // max(1, H * itemsize)) // 16 * 16)
    return S if rows >= S else rows


# ----------------------------------------------------------------------------- wrapper


def combined_dropout(x, seed, *, p=0.0, word_p=0.05, locked_p=0.5, training=True, tile_s=None):
    """JAX/Pallas equivalent of eznlp CombinedDropout.forward for x of shape (B, S, H)."""
    if (not training) or (p == 0.0 and word_p == 0.0 and locked_p == 0.0):
        return x

    B, S, H = x.shape
    dtype = x.dtype
    elem_mask, word_mask, locked_mask = _make_masks(seed, (B, S, H), dtype, p, word_p, locked_p)

    if tile_s is None:
        tile_s = _choose_tile_s(S, H, dtype)
    tile_s = min(tile_s, S)

    grid = (B, pl.cdiv(S, tile_s))

    in_specs = [
        pl.BlockSpec((1, tile_s, H), lambda b, s: (b, s, 0)),  # x
        pl.BlockSpec((1, tile_s, 1), lambda b, s: (b, s, 0)),  # word mask (broadcast over lanes)
        pl.BlockSpec((1, 1, H), lambda b, s: (b, 0, 0)),       # locked mask (same for all S-tiles)
    ]
    inputs = [x, word_mask, locked_mask]

    if elem_mask is not None:
        in_specs.append(pl.BlockSpec((1, tile_s, H), lambda b, s: (b, s, 0)))
        inputs.append(elem_mask)
        kernel = _dropout_kernel_elem
    else:
        kernel = _dropout_kernel

    return pl.pallas_call(
        kernel,
        out_shape=jax.ShapeDtypeStruct(x.shape, dtype),
        grid=grid,
        in_specs=in_specs,
        out_specs=pl.BlockSpec((1, tile_s, H), lambda b, s: (b, s, 0)),
        compiler_params=pltpu.CompilerParams(
            dimension_semantics=("parallel", "parallel"),
        ),
    )(*inputs)


# ----------------------------------------------------------------------------- pure-JAX reference


def _reference(x, seed, *, p=0.0, word_p=0.05, locked_p=0.5):
    elem_mask, word_mask, locked_mask = _make_masks(seed, x.shape, x.dtype, p, word_p, locked_p)
    y = x
    if elem_mask is not None:
        y = y * elem_mask
    return y * word_mask * locked_mask


# ----------------------------------------------------------------------------- demo / self-check


if __name__ == "__main__":
    B, S, H = 2, 8, 32  # (batch, seq_len, hidden)
    key = jax.random.PRNGKey(0)
    x = jax.random.normal(key, (B, S, H), dtype=jnp.float32)

    # Default CombinedDropout(p=0.0, word_p=0.05, locked_p=0.5), training mode.
    y = combined_dropout(x, seed=0, p=0.0, word_p=0.05, locked_p=0.5, training=True)
    y = jax.block_until_ready(y)
    assert y.shape == x.shape and y.dtype == x.dtype
    y_ref = _reference(x, 0, p=0.0, word_p=0.05, locked_p=0.5)
    assert bool(jnp.allclose(y, y_ref, atol=1e-6, rtol=1e-6))

    # Path with all three dropouts active (p > 0).
    y2 = combined_dropout(x, seed=3, p=0.1, word_p=0.05, locked_p=0.5, training=True)
    y2 = jax.block_until_ready(y2)
    y2_ref = _reference(x, 3, p=0.1, word_p=0.05, locked_p=0.5)
    assert bool(jnp.allclose(y2, y2_ref, atol=1e-6, rtol=1e-6))

    # Eval-mode identity path (pure passthrough, no kernel launch).
    y_eval = combined_dropout(x, seed=0, training=False)
    assert bool(jnp.allclose(y_eval, x))

    print("KERNEL_OK")
</pallas_src>

<mosaic_0001>
module attributes {stable_mosaic.version = 11 : i64} {
  func.func @_dropout_kernel(%arg0: i32, %arg1: i32, %arg2: memref<1x8x32xf32, #tpu.memory_space<vmem>>, %arg3: memref<1x8x1xf32, #tpu.memory_space<vmem>>, %arg4: memref<1x1x32xf32, #tpu.memory_space<vmem>>, %arg5: memref<1x8x32xf32, #tpu.memory_space<vmem>>) attributes {dimension_semantics = [#tpu.dimension_semantics<parallel>, #tpu.dimension_semantics<parallel>], iteration_bounds = array<i64: 2, 1>, scalar_prefetch = 0 : i64, scratch_operands = 0 : i64, tpu.core_type = #tpu.core_type<tc>, window_params = [{transform_indices = @transform_0, window_bounds = array<i64: 1, 8, 32>}, {transform_indices = @transform_1, window_bounds = array<i64: 1, 8, 1>}, {transform_indices = @transform_2, window_bounds = array<i64: 1, 1, 32>}, {transform_indices = @transform_3, window_bounds = array<i64: 1, 8, 32>}]} {
    %c0 = arith.constant 0 : index
    %c0_0 = arith.constant 0 : index
    %c0_1 = arith.constant 0 : index
    %0 = vector.load %arg2[%c0, %c0_0, %c0_1] : memref<1x8x32xf32, #tpu.memory_space<vmem>>, vector<1x8x32xf32>
    %c0_2 = arith.constant 0 : index
    %c0_3 = arith.constant 0 : index
    %c0_4 = arith.constant 0 : index
    %1 = vector.load %arg3[%c0_2, %c0_3, %c0_4] : memref<1x8x1xf32, #tpu.memory_space<vmem>>, vector<1x8x1xf32>
    %2 = vector.broadcast %1 : vector<1x8x1xf32> to vector<1x8x32xf32>
    %3 = arith.mulf %0, %2 : vector<1x8x32xf32>
    %c0_5 = arith.constant 0 : index
    %c0_6 = arith.constant 0 : index
    %c0_7 = arith.constant 0 : index
    %4 = vector.load %arg4[%c0_5, %c0_6, %c0_7] : memref<1x1x32xf32, #tpu.memory_space<vmem>>, vector<1x1x32xf32>
    %5 = vector.broadcast %4 : vector<1x1x32xf32> to vector<1x8x32xf32>
    %6 = arith.mulf %3, %5 : vector<1x8x32xf32>
    %c0_8 = arith.constant 0 : index
    %c0_9 = arith.constant 0 : index
    %c0_10 = arith.constant 0 : index
    %7 = vector.load %arg5[%c0_8, %c0_9, %c0_10] : memref<1x8x32xf32, #tpu.memory_space<vmem>>, vector<1x8x32xf32>
    tpu.vector_store %arg5[%c0_8, %c0_9, %c0_10], %6 {strides = array<i32>} : memref<1x8x32xf32, #tpu.memory_space<vmem>>, vector<1x8x32xf32>,
    return
  }
  func.func @transform_0(%arg0: i32, %arg1: i32) -> (i32, i32, i32) {
    %c0_i32 = arith.constant 0 : i32
    %c0_i32_0 = arith.constant 0 : i32
    return %arg0, %arg1, %c0_i32 : i32, i32, i32
  }
  func.func @transform_1(%arg0: i32, %arg1: i32) -> (i32, i32, i32) {
    %c0_i32 = arith.constant 0 : i32
    %c0_i32_0 = arith.constant 0 : i32
    return %arg0, %arg1, %c0_i32 : i32, i32, i32
  }
  func.func @transform_2(%arg0: i32, %arg1: i32) -> (i32, i32, i32) {
    %c0_i32 = arith.constant 0 : i32
    %c0_i32_0 = arith.constant 0 : i32
    %c0_i32_1 = arith.constant 0 : i32
    return %arg0, %c0_i32, %c0_i32_0 : i32, i32, i32
  }
  func.func @transform_3(%arg0: i32, %arg1: i32) -> (i32, i32, i32) {
    %c0_i32 = arith.constant 0 : i32
    %c0_i32_0 = arith.constant 0 : i32
    return %arg0, %arg1, %c0_i32 : i32, i32, i32
  }
}

</mosaic_0001>

<llo_original>
// kernel: tpu_custom_call.1
$region0: #{tpu_custom_call.1}
  #allocation0 [shape = 'u32[]', space=smem, size = 0x4, offset = 0x4, fixed_abs, tag = 'smem constant byte address 0x4 - core index']
  #allocation1 [shape = 'u32[144,128]{1,0:T(1,128)}', space=vmem, size = 0x12000, scoped, tag = 'internal scratch']
  %s0 = inlined_call_operand.vmem [shape: f32[2,8,32], index: 0, kind: input, shape index: {}]
  %s1 = inlined_call_operand.vmem [shape: f32[2,8,1], index: 1, kind: input, shape index: {}]
  %s2 = inlined_call_operand.vmem [shape: f32[2,1,32], index: 2, kind: input, shape index: {}]
  %s3 = inlined_call_operand.hbm [shape: f32[2,8,32], index: 3, kind: output, shape index: {}]
  %s4 = sld [smem:[#allocation0]]
  $region45: #{tpu_custom_call.1} parent=0
    _
  %s6 = ssub.s32 1, %s4
  %s7 = scalar_select 0, %s6, %s4
  $region1: #{tpu_custom_call.1} parent=0
    #allocation2 [shape = 'u8[8192]{0}', space=vmem, size = 0x2000, scoped, tag = 'output window, operand 0']
    #allocation3 [shape = 's32[2]{0}', space=sflag, size = 0x8, scoped, tag = 'scoped memory for tpu_custom_call.1']
    %8 = vsyncpa [#allocation3], 0
    %s9 = scalar_lea.sflag [#allocation3], 1
    %10 = vsyncpa %s9, 0
    loop: start=0, step=1, limit=4
    $region2: #{tpu_custom_call.1} parent=1 // loop_pre_header
      _
    $region3: #{tpu_custom_call.1} parent=1 // loop_header
      %s12 = sphi 0, %s16
      %p13 = scmp.ge.s32.totalorder %s12, 4
      %s19 = sphi 0, %s31
      %s20 = sphi 0, %s27
      %s21 = sphi 0, %s19
      %s22 = sphi 0, %s20
      %s23 = sphi 0, %s21
      %s24 = sphi 0, %s22
      %s36 = sphi 0, %s38
      %s39 = sphi 0, %s36
      %s40 = sphi 0, %s39
      %s56 = sphi 0, %s40
      %s64 = sphi 0, %s66
      %s67 = sphi 0, %s64
      %s68 = sphi 0, %s67
      %s84 = sphi 0, %s68
      %s90 = sphi 0, %s92
      %s93 = sphi 0, %s90
      %s94 = sphi 0, %s93
      %s110 = sphi 0, %s94
      %s118 = sphi 0, %s120
      %s121 = sphi 0, %s118
      %s122 = sphi 0, %s121
      %s138 = sphi 0, %s122
    $region4: #{tpu_custom_call.1} parent=1 // loop_header_branch
      %15 = sbr.rel (%p13) target = $region8
    $region5: #{tpu_custom_call.1} parent=1 // loop_body
      %s17 = ssub.s32 %s12, 1
      %s18 = ssub.s32 %s12, 2
      %s25 = sadd.s32 1, %s20
      %p26 = scmp.ge.s32.totalorder %s25, 1
      %s27 = scalar_select %p26, 0, %s25
      %s28 = sadd.s32 1, %s19
      %s29 = scalar_select %p26, %s28, %s19
      %p30 = scmp.ge.s32.totalorder %s29, 2
      %s31 = scalar_select %p30, 0, %s29
      %s32 = ssub.s32 %s19, %s31
      %s33 = ssub.s32 %s20, %s27
      %s34 = sor.u32 %s32, %s33
      %p35 = scmp.eq.s32.totalorder %s34, 0
      %s37 = sadd.s32 %s36, 1
      %s38 = scalar_select %p35, %s36, %s37
      %p41 = pneg %p35
      %p42 = scmp.eq.s32.totalorder %s12, 1
      %p43 = por %p41, %p42
      %p44 = scmp.ne.s32.totalorder %s36, %s39
      %p45 = scmp.eq.s32.totalorder %s12, 0
      %p46 = por %p44, %p45
      %p47 = scmp.ne.s32.totalorder %s36, %s39
      %p48 = scmp.eq.s32.totalorder %s17, 1
      %p49 = por %p47, %p48
      %p50 = scmp.ne.s32.totalorder %s39, %s40
      %p51 = scmp.eq.s32.totalorder %s17, 0
      %p52 = por %p50, %p51
      %p53 = scmp.ne.s32.totalorder %s39, %s40
      %p54 = scmp.eq.s32.totalorder %s18, 1
      %p55 = por %p53, %p54
      %p57 = scmp.ne.s32.totalorder %s40, %s56
      %p58 = scmp.eq.s32.totalorder %s18, 0
      %p59 = por %p57, %p58
      %s60 = ssub.s32 %s19, %s31
      %s61 = ssub.s32 %s20, %s27
      %s62 = sor.u32 %s60, %s61
      %p63 = scmp.eq.s32.totalorder %s62, 0
      %s65 = sadd.s32 %s64, 1
      %s66 = scalar_select %p63, %s64, %s65
      %p69 = pneg %p63
      %p70 = scmp.eq.s32.totalorder %s12, 1
      %p71 = por %p69, %p70
      %p72 = scmp.ne.s32.totalorder %s64, %s67
      %p73 = scmp.eq.s32.totalorder %s12, 0
      %p74 = por %p72, %p73
      %p75 = scmp.ne.s32.totalorder %s64, %s67
      %p76 = scmp.eq.s32.totalorder %s17, 1
      %p77 = por %p75, %p76
      %p78 = scmp.ne.s32.totalorder %s67, %s68
      %p79 = scmp.eq.s32.totalorder %s17, 0
      %p80 = por %p78, %p79
      %p81 = scmp.ne.s32.totalorder %s67, %s68
      %p82 = scmp.eq.s32.totalorder %s18, 1
      %p83 = por %p81, %p82
      %p85 = scmp.ne.s32.totalorder %s68, %s84
      %p86 = scmp.eq.s32.totalorder %s18, 0
      %p87 = por %p85, %p86
      %s88 = ssub.s32 %s19, %s31
      %p89 = scmp.eq.s32.totalorder %s88, 0
      %s91 = sadd.s32 %s90, 1
      %s92 = scalar_select %p89, %s90, %s91
      %p95 = pneg %p89
      %p96 = scmp.eq.s32.totalorder %s12, 1
      %p97 = por %p95, %p96
      %p98 = scmp.ne.s32.totalorder %s90, %s93
      %p99 = scmp.eq.s32.totalorder %s12, 0
      %p100 = por %p98, %p99
      %p101 = scmp.ne.s32.totalorder %s90, %s93
      %p102 = scmp.eq.s32.totalorder %s17, 1
      %p103 = por %p101, %p102
      %p104 = scmp.ne.s32.totalorder %s93, %s94
      %p105 = scmp.eq.s32.totalorder %s17, 0
      %p106 = por %p104, %p105
      %p107 = scmp.ne.s32.totalorder %s93, %s94
      %p108 = scmp.eq.s32.totalorder %s18, 1
      %p109 = por %p107, %p108
      %p111 = scmp.ne.s32.totalorder %s94, %s110
      %p112 = scmp.eq.s32.totalorder %s18, 0
      %p113 = por %p111, %p112
      %s114 = ssub.s32 %s19, %s31
      %s115 = ssub.s32 %s20, %s27
      %s116 = sor.u32 %s114, %s115
      %p117 = scmp.eq.s32.totalorder %s116, 0
      %s119 = sadd.s32 %s118, 1
      %s120 = scalar_select %p117, %s118, %s119
      %p123 = pneg %p117
      %p124 = scmp.eq.s32.totalorder %s12, 1
      %p125 = por %p123, %p124
      %p126 = scmp.ne.s32.totalorder %s118, %s121
      %p127 = scmp.eq.s32.totalorder %s12, 0
      %p128 = por %p126, %p127
      %p129 = scmp.ne.s32.totalorder %s118, %s121
      %p130 = scmp.eq.s32.totalorder %s17, 1
      %p131 = por %p129, %p130
      %p132 = scmp.ne.s32.totalorder %s121, %s122
      %p133 = scmp.eq.s32.totalorder %s17, 0
      %p134 = por %p132, %p133
      %p135 = scmp.ne.s32.totalorder %s121, %s122
      %p136 = scmp.eq.s32.totalorder %s18, 1
      %p137 = por %p135, %p136
      %p139 = scmp.ne.s32.totalorder %s122, %s138
      %p140 = scmp.eq.s32.totalorder %s18, 0
      %p141 = por %p139, %p140
      %p142 = scmp.le.s32.totalorder 1, %s12
      %p143 = scmp.lt.s32.totalorder %s12, 3
      %p144 = pnand %p142, %p143
      %p145 = pneg %p144
      // Predicated region
      $region9: #{tpu_custom_call.1} parent=5 // pred_check
        _
      $region10: #{tpu_custom_call.1} parent=5 // pred_check_branch
        %147 = sbr.rel (%p144) target = $region12
      $region11: #{tpu_custom_call.1} parent=5 // pred_region
        %s148 = ssub.s32 %s12, 1
      $region12: #{tpu_custom_call.1} parent=5 // pred_fallthru
        _
      %p149 = scmp.lt.s32.totalorder %s12, 2
      // Predicated region
      $region13: #{tpu_custom_call.1} parent=5 // pred_check
        %p150 = pneg %p149
      $region14: #{tpu_custom_call.1} parent=5 // pred_check_branch
        %152 = sbr.rel (%p150) target = $region16
      $region15: #{tpu_custom_call.1} parent=5 // pred_region
        // Predicated region
        $region17: #{tpu_custom_call.1} parent=15 // pred_check
          %p153 = pneg %p46
        $region18: #{tpu_custom_call.1} parent=15 // pred_check_branch
          %155 = sbr.rel (%p153) target = $region20
        $region19: #{tpu_custom_call.1} parent=15 // pred_region
          %p156 = scmp.lt.s32.totalorder %s19, 1
          %s157 = scalar_select %p156, %s19, 1
          %p158 = scmp.lt.s32.totalorder %s20, 0
          %s159 = scalar_select %p158, %s20, 0
          %s160 = sadd.s32 %s159, %s157
          %s161 = smul.addr %s160, 8
          %s162 = scalar_lea.vmem %s0, %s161
        $region20: #{tpu_custom_call.1} parent=15 // pred_fallthru
          _
        // Predicated region
        $region21: #{tpu_custom_call.1} parent=15 // pred_check
          %p163 = pneg %p74
        $region22: #{tpu_custom_call.1} parent=15 // pred_check_branch
          %165 = sbr.rel (%p163) target = $region24
        $region23: #{tpu_custom_call.1} parent=15 // pred_region
          %p166 = scmp.lt.s32.totalorder %s19, 1
          %s167 = scalar_select %p166, %s19, 1
          %p168 = scmp.lt.s32.totalorder %s20, 0
          %s169 = scalar_select %p168, %s20, 0
          %s170 = sadd.s32 %s169, %s167
          %s171 = smul.addr %s170, 8
          %s172 = scalar_lea.vmem %s1, %s171
        $region24: #{tpu_custom_call.1} parent=15 // pred_fallthru
          _
        // Predicated region
        $region25: #{tpu_custom_call.1} parent=15 // pred_check
          %p173 = pneg %p100
        $region26: #{tpu_custom_call.1} parent=15 // pred_check_branch
          %175 = sbr.rel (%p173) target = $region28
        $region27: #{tpu_custom_call.1} parent=15 // pred_region
          %p176 = scmp.lt.s32.totalorder %s19, 1
          %s177 = scalar_select %p176, %s19, 1
          %s178 = scalar_lea.vmem %s2, %s177
        $region28: #{tpu_custom_call.1} parent=15 // pred_fallthru
          _
      $region16: #{tpu_custom_call.1} parent=5 // pred_fallthru
        _
      %p179 = scmp.le.s32.totalorder 1, %s12
      %p180 = scmp.lt.s32.totalorder %s12, 3
      %p181 = pnand %p179, %p180
      %p182 = pneg %p181
      // Predicated region
      $region29: #{tpu_custom_call.1} parent=5 // pred_check
        _
      $region30: #{tpu_custom_call.1} parent=5 // pred_check_branch
        %184 = sbr.rel (%p181) target = $region32
      $region31: #{tpu_custom_call.1} parent=5 // pred_region
        %s185 = ssub.s32 %s12, 1
        %p186 = scmp.lt.s32.totalorder %s21, 1
        %s187 = scalar_select %p186, %s21, 1
        %p188 = scmp.lt.s32.totalorder %s22, 0
        %s189 = scalar_select %p188, %s22, 0
        %s190 = sadd.s32 %s189, %s187
        %s191 = smul.addr %s190, 8
        %s192 = scalar_lea.vmem %s0, %s191
        %p193 = pneg %p52
        %p194 = pneg %p49
        %p195 = scmp.lt.s32.totalorder %s21, 1
        %s196 = scalar_select %p195, %s21, 1
        %p197 = scmp.lt.s32.totalorder %s22, 0
        %s198 = scalar_select %p197, %s22, 0
        %s199 = sadd.s32 %s198, %s196
        %s200 = smul.addr %s199, 8
        %s201 = scalar_lea.vmem %s1, %s200
        %p202 = pneg %p80
        %p203 = pneg %p77
        %p204 = scmp.lt.s32.totalorder %s21, 1
        %s205 = scalar_select %p204, %s21, 1
        %s206 = scalar_lea.vmem %s2, %s205
        %p207 = pneg %p106
        %p208 = pneg %p103
        %p209 = pneg %p134
        %p210 = pneg %p131
        %s211 = sand.u32 %s121, 1
        %s212 = scalar_lea.sflag [#allocation3], %s211
        %s213 = sand.u32 %s121, 1
        %s214 = smul.addr %s213, 8
        %s215 = scalar_lea.vmem [#allocation2], %s214
        %p216 = scmp.lt.s32.totalorder %s21, 1
        %s217 = scalar_select %p216, %s21, 1
        %p218 = scmp.lt.s32.totalorder %s22, 0
        %s219 = scalar_select %p218, %s22, 0
        %s220 = sadd.s32 %s219, %s217
        %s221 = smul.addr %s220, 8
        %s222 = scalar_lea.vmem %s0, %s221
        %p223 = scmp.lt.s32.totalorder %s21, 1
        %s224 = scalar_select %p223, %s21, 1
        %p225 = scmp.lt.s32.totalorder %s22, 0
        %s226 = scalar_select %p225, %s22, 0
        %s227 = sadd.s32 %s226, %s224
        %s228 = smul.addr %s227, 8
        %s229 = scalar_lea.vmem %s1, %s228
        %p230 = scmp.lt.s32.totalorder %s21, 1
        %s231 = scalar_select %p230, %s21, 1
        %s232 = scalar_lea.vmem %s2, %s231
        %v233 = vld [vmem:[%s222] sm:$0xff]
        %v234 = vld [vmem:[%s229] sm:$0xff]
        %236 = vset.pattern.permute.xlu0 0
        %237 = vperm.xlu0 %236, %v234
        %v238 = vpop.permute.xlu0 %237
        %v240 = vmul.f32 %v233, %v238
        %v241 = vld [vmem:[%s232] sm:$0x1]
        %v243 = vlaneseq
        %v244 = vshrl.u32 %v243, 7
        %v245 = vsub.s32 0, %v244
        %v246 = vrot.slane %v241, %v245
        %v248 = vmul.f32 %v240, %v246
        %vm249 = vcmask 261120
        %250 = vst.msk [vmem:[%s215] sm:$0xff] %vm249, %v248
        %s251 = sand.u32 %s121, 1
        %s252 = scalar_lea.sflag [#allocation3], %s251
        %s253 = sand.u32 %s121, 1
        %s254 = smul.addr %s253, 8
        %s255 = scalar_lea.vmem [#allocation2], %s254
        // Predicated region
        $region33: #{tpu_custom_call.1} parent=31 // pred_check
          %p256 = pneg %p131
        $region34: #{tpu_custom_call.1} parent=31 // pred_check_branch
          %258 = sbr.rel (%p256) target = $region36
        $region35: #{tpu_custom_call.1} parent=31 // pred_region
          %s260 = ssub.s32 128, 128
          %261 = vsyncadd %s252, %s260
          %s262 = sadd.s32 %s22, %s21
          %s263 = smul.addr %s262, 128
          %s264 = scalar_lea.hbm %s3, %s263
          %s266 = sshll.u32 %s255, 4
          %s267 = int_to_ptr.vmem [resolvable:$true] %s266
          %269 = dma.vmem_to_hbm [thread:$0]  %s267, 128, %s264, %s252
        $region36: #{tpu_custom_call.1} parent=31 // pred_fallthru
          _
      $region32: #{tpu_custom_call.1} parent=5 // pred_fallthru
        _
      %p270 = scmp.le.s32.totalorder 2, %s12
      // Predicated region
      $region37: #{tpu_custom_call.1} parent=5 // pred_check
        %p271 = pneg %p270
      $region38: #{tpu_custom_call.1} parent=5 // pred_check_branch
        %273 = sbr.rel (%p271) target = $region40
      $region39: #{tpu_custom_call.1} parent=5 // pred_region
        %s274 = ssub.s32 %s12, 2
        // Predicated region
        $region41: #{tpu_custom_call.1} parent=39 // pred_check
          %p275 = pneg %p137
        $region42: #{tpu_custom_call.1} parent=39 // pred_check_branch
          %277 = sbr.rel (%p275) target = $region44
        $region43: #{tpu_custom_call.1} parent=39 // pred_region
          %s278 = sand.u32 %s122, 1
          %s279 = scalar_lea.sflag [#allocation3], %s278
          %s280 = sand.u32 %s122, 1
          %s281 = smul.addr %s280, 8
          %s282 = scalar_lea.vmem [#allocation2], %s281
          %283 = dma.done %s279, 128
        $region44: #{tpu_custom_call.1} parent=39 // pred_fallthru
          _
      $region40: #{tpu_custom_call.1} parent=5 // pred_fallthru
        _
    $region6: #{tpu_custom_call.1} parent=1 // loop_footer
      %s16 = sadd.s32 1, %s12
    $region7: #{tpu_custom_call.1} parent=1 // loop_footer_branch
      %11 = sbr.rel target = $region3
    $region8: #{tpu_custom_call.1} parent=1 // loop_exit
      _
    %284 = vsyncpa [#allocation3], 1
    %s285 = scalar_lea.sflag [#allocation3], 1
    %286 = vsyncpa %s285, 1

</llo_original>
